<compile_context>
chip_gen: v7x
topology: tpu7x:2x2x1
jax: 0.10.0
libtpu: 0.0.40
codegen_flags: <defaults>
</compile_context>

<pallas_src>
import functools

import jax
import jax.numpy as jnp
from jax import lax
from jax.experimental import pallas as pl
from jax.experimental.pallas import tpu as pltpu
import numpy as np


LANE = 128                      # TPU lane width: channel dims padded to this
_BN_EPS = 1e-5
_VMEM_LIMIT = 48 * 1024 * 1024  # explicit budget; leaves headroom on v7x 64MiB


# ----------------------------------------------------------------------------
# Small helpers
# ----------------------------------------------------------------------------
def _round_up(x, m):
    return (x + m - 1) // m * m


def _pad2d(a, rows, cols, dtype):
    r, c = a.shape
    a = a.astype(dtype)
    if r == rows and c == cols:
        return a
    return jnp.pad(a, ((0, rows - r), (0, cols - c)))


def _pad_row(v, cols):
    v = v.reshape(-1).astype(jnp.float32)
    n = v.shape[0]
    if n != cols:
        v = jnp.pad(v, (0, cols - n))
    return v.reshape(1, cols)


def _tiles(M, K, N):
    """Pick 128-aligned tiles; biggest that comfortably fits VMEM."""
    K_pad = _round_up(K, LANE)
    N_pad = _round_up(N, LANE)
    tm = min(256, _round_up(M, 16))          # 16-aligned rows (bf16 sublanes)
    M_pad = _round_up(M, tm)
    tn = 256 if N_pad % 256 == 0 else 128
    tk = 512 if K_pad % 512 == 0 else (256 if K_pad % 256 == 0 else 128)
    return M_pad, K_pad, N_pad, tm, tk, tn


def _compiler_params():
    return pltpu.CompilerParams(
        dimension_semantics=("parallel", "parallel", "arbitrary"),
        vmem_limit_bytes=_VMEM_LIMIT)


# ----------------------------------------------------------------------------
# Pallas kernels (tiled matmul + fused BN/mask epilogue)
# ----------------------------------------------------------------------------
def _mm_bn_kernel(x_ref, w_ref, scale_ref, bias_ref, o_ref, acc_ref, *, relu):
    k = pl.program_id(2)

    @pl.when(k == 0)
    def _():
        acc_ref[...] = jnp.zeros_like(acc_ref)

    acc_ref[...] += jnp.dot(x_ref[...], w_ref[...],
                            preferred_element_type=jnp.float32)

    @pl.when(k == pl.num_programs(2) - 1)
    def _():
        y = acc_ref[...] * scale_ref[...] + bias_ref[...]   # BN (+mask) folded
        if relu:
            y = jnp.maximum(y, 0.0)
        o_ref[...] = y.astype(o_ref.dtype)


def _mm_bn_proj_kernel(x_ref, w_ref, xs_ref, ws_ref, s_ref, ss_ref, b_ref,
                       o_ref, acc_ref):
    """conv3 + projection shortcut fused: relu(acc*s + (xs@ws)*ss + b)."""
    k = pl.program_id(2)

    @pl.when(k == 0)
    def _():
        acc_ref[...] = jnp.zeros_like(acc_ref)

    acc_ref[...] += jnp.dot(x_ref[...], w_ref[...],
                            preferred_element_type=jnp.float32)

    @pl.when(k == pl.num_programs(2) - 1)
    def _():
        sc = jnp.dot(xs_ref[...], ws_ref[...],
                     preferred_element_type=jnp.float32)
        y = acc_ref[...] * s_ref[...] + sc * ss_ref[...] + b_ref[...]
        o_ref[...] = jnp.maximum(y, 0.0).astype(o_ref.dtype)


def _mm_bn_res_kernel(x_ref, w_ref, res_ref, s_ref, b_ref, m_ref,
                      o_ref, acc_ref):
    """conv3 + identity shortcut: relu(acc*s + b + res*m)."""
    k = pl.program_id(2)

    @pl.when(k == 0)
    def _():
        acc_ref[...] = jnp.zeros_like(acc_ref)

    acc_ref[...] += jnp.dot(x_ref[...], w_ref[...],
                            preferred_element_type=jnp.float32)

    @pl.when(k == pl.num_programs(2) - 1)
    def _():
        y = (acc_ref[...] * s_ref[...] + b_ref[...]
             + res_ref[...].astype(jnp.float32) * m_ref[...])
        o_ref[...] = jnp.maximum(y, 0.0).astype(o_ref.dtype)


# ----------------------------------------------------------------------------
# pallas_call wrappers
# ----------------------------------------------------------------------------
def fused_matmul_bn(x2d, w, scale, bias, *, relu, out_dtype):
    """out = maybe_relu((x2d @ w) * scale + bias); tiled, bf16 MXU, f32 acc."""
    M, K = x2d.shape
    _, N = w.shape
    M_pad, K_pad, N_pad, tm, tk, tn = _tiles(M, K, N)

    xp = _pad2d(x2d, M_pad, K_pad, jnp.bfloat16)
    wp = _pad2d(w, K_pad, N_pad, jnp.bfloat16)
    sp = _pad_row(scale, N_pad)
    bp = _pad_row(bias, N_pad)

    grid = (M_pad // tm, N_pad // tn, K_pad // tk)
    flops = 2 * M_pad * N_pad * K_pad
    bytes_accessed = ((xp.size + wp.size) * 2 + (sp.size + bp.size) * 4
                      + M_pad * N_pad * jnp.dtype(out_dtype).itemsize)

    out = pl.pallas_call(
        functools.partial(_mm_bn_kernel, relu=relu),
        out_shape=jax.ShapeDtypeStruct((M_pad, N_pad), out_dtype),
        grid=grid,
        in_specs=[
            pl.BlockSpec((tm, tk), lambda i, j, k: (i, k)),
            pl.BlockSpec((tk, tn), lambda i, j, k: (k, j)),
            pl.BlockSpec((1, tn), lambda i, j, k: (0, j)),
            pl.BlockSpec((1, tn), lambda i, j, k: (0, j)),
        ],
        out_specs=pl.BlockSpec((tm, tn), lambda i, j, k: (i, j)),
        scratch_shapes=[pltpu.VMEM((tm, tn), jnp.float32)],
        compiler_params=_compiler_params(),
        cost_estimate=pl.CostEstimate(flops=flops, transcendentals=0,
                                      bytes_accessed=bytes_accessed),
    )(xp, wp, sp, bp)
    return out[:M, :N]


def fused_conv3_proj(x2d, w, xs2d, ws, s3, b3, ss, bs, mask, *, out_dtype):
    """relu(bn3(x2d@w) + bns(xs2d@ws)) * mask, all fused in one kernel."""
    M, K = x2d.shape
    _, N = w.shape
    Ks = xs2d.shape[1]
    M_pad, K_pad, N_pad, tm, tk, tn = _tiles(M, K, N)
    Ks_pad = _round_up(Ks, LANE)

    xp = _pad2d(x2d, M_pad, K_pad, jnp.bfloat16)
    wp = _pad2d(w, K_pad, N_pad, jnp.bfloat16)
    xsp = _pad2d(xs2d, M_pad, Ks_pad, jnp.bfloat16)
    wsp = _pad2d(ws, Ks_pad, N_pad, jnp.bfloat16)
    # Fold the HAT mask (sigmoid > 0) into both BN affines; single bias term.
    s3m = _pad_row(s3 * mask, N_pad)
    ssm = _pad_row(ss * mask, N_pad)
    bm = _pad_row((b3 + bs) * mask, N_pad)

    grid = (M_pad // tm, N_pad // tn, K_pad // tk)
    flops = 2 * M_pad * N_pad * (K_pad + Ks_pad)
    bytes_accessed = ((xp.size + wp.size + xsp.size + wsp.size) * 2
                      + (s3m.size + ssm.size + bm.size) * 4
                      + M_pad * N_pad * jnp.dtype(out_dtype).itemsize)

    out = pl.pallas_call(
        _mm_bn_proj_kernel,
        out_shape=jax.ShapeDtypeStruct((M_pad, N_pad), out_dtype),
        grid=grid,
        in_specs=[
            pl.BlockSpec((tm, tk), lambda i, j, k: (i, k)),
            pl.BlockSpec((tk, tn), lambda i, j, k: (k, j)),
            pl.BlockSpec((tm, Ks_pad), lambda i, j, k: (i, 0)),
            pl.BlockSpec((Ks_pad, tn), lambda i, j, k: (0, j)),
            pl.BlockSpec((1, tn), lambda i, j, k: (0, j)),
            pl.BlockSpec((1, tn), lambda i, j, k: (0, j)),
            pl.BlockSpec((1, tn), lambda i, j, k: (0, j)),
        ],
        out_specs=pl.BlockSpec((tm, tn), lambda i, j, k: (i, j)),
        scratch_shapes=[pltpu.VMEM((tm, tn), jnp.float32)],
        compiler_params=_compiler_params(),
        cost_estimate=pl.CostEstimate(flops=flops, transcendentals=0,
                                      bytes_accessed=bytes_accessed),
    )(xp, wp, xsp, wsp, s3m, ssm, bm)
    return out[:M, :N]


def fused_conv3_res(x2d, w, res2d, s3, b3, mask, *, out_dtype):
    """relu(bn3(x2d@w) + res) * mask (identity shortcut), fused."""
    M, K = x2d.shape
    _, N = w.shape
    M_pad, K_pad, N_pad, tm, tk, tn = _tiles(M, K, N)

    xp = _pad2d(x2d, M_pad, K_pad, jnp.bfloat16)
    wp = _pad2d(w, K_pad, N_pad, jnp.bfloat16)
    rp = _pad2d(res2d, M_pad, N_pad, jnp.float32)
    s3m = _pad_row(s3 * mask, N_pad)
    bm = _pad_row(b3 * mask, N_pad)
    mp = _pad_row(mask, N_pad)

    grid = (M_pad // tm, N_pad // tn, K_pad // tk)
    flops = 2 * M_pad * N_pad * K_pad
    bytes_accessed = ((xp.size + wp.size) * 2 + rp.size * 4
                      + (s3m.size + bm.size + mp.size) * 4
                      + M_pad * N_pad * jnp.dtype(out_dtype).itemsize)

    out = pl.pallas_call(
        _mm_bn_res_kernel,
        out_shape=jax.ShapeDtypeStruct((M_pad, N_pad), out_dtype),
        grid=grid,
        in_specs=[
            pl.BlockSpec((tm, tk), lambda i, j, k: (i, k)),
            pl.BlockSpec((tk, tn), lambda i, j, k: (k, j)),
            pl.BlockSpec((tm, tn), lambda i, j, k: (i, j)),
            pl.BlockSpec((1, tn), lambda i, j, k: (0, j)),
            pl.BlockSpec((1, tn), lambda i, j, k: (0, j)),
            pl.BlockSpec((1, tn), lambda i, j, k: (0, j)),
        ],
        out_specs=pl.BlockSpec((tm, tn), lambda i, j, k: (i, j)),
        scratch_shapes=[pltpu.VMEM((tm, tn), jnp.float32)],
        compiler_params=_compiler_params(),
        cost_estimate=pl.CostEstimate(flops=flops, transcendentals=0,
                                      bytes_accessed=bytes_accessed),
    )(xp, wp, rp, s3m, bm, mp)
    return out[:M, :N]


# ----------------------------------------------------------------------------
# Host-side glue
# ----------------------------------------------------------------------------
def fold_bn(bn):
    gamma, beta, mean, var = bn
    scale = gamma / jnp.sqrt(var + _BN_EPS)
    bias = beta - mean * scale
    return scale, bias


def im2col_3x3(x_nhwc, stride):
    """3x3 patches with padding=1 -> (N*Ho*Wo, 9*C), tap-major (kh, kw, cin)."""
    N, H, W, C = x_nhwc.shape
    xp = jnp.pad(x_nhwc, ((0, 0), (1, 1), (1, 1), (0, 0)))
    Ho = (H + 2 - 3) // stride + 1
    Wo = (W + 2 - 3) // stride + 1
    cols = []
    for kh in range(3):
        for kw in range(3):
            sl = xp[:, kh:kh + (Ho - 1) * stride + 1:stride,
                       kw:kw + (Wo - 1) * stride + 1:stride, :]
            cols.append(sl)
    patches = jnp.stack(cols, axis=3)              # (N, Ho, Wo, 9, C)
    return patches.reshape(N * Ho * Wo, 9 * C), Ho, Wo


def bottleneck_forward(x_nchw, params, masks, strides, masks_split):
    """Pallas implementation of BottleNeck.forward(x, masks). Input NCHW."""
    gcs = masks[masks_split[0]:masks_split[1]]
    N, Cin, H, W = x_nchw.shape
    C = params["w1"].shape[1]                       # out_channels
    C4 = 4 * C
    x = jnp.transpose(x_nchw, (0, 2, 3, 1))         # NCHW -> NHWC

    # conv1: 1x1, BN, ReLU, mask gc1 (mask folded into BN scale/bias)
    s1, b1 = fold_bn(params["bn1"])
    o1 = fused_matmul_bn(x.reshape(N * H * W, Cin), params["w1"],
                         s1 * gcs[0], b1 * gcs[0], relu=True,
                         out_dtype=jnp.bfloat16)
    o1 = o1.reshape(N, H, W, C)

    # conv2: 3x3, stride=strides, pad=1, BN, ReLU, mask gc2
    # TODO(synk): stream the 9 taps from HBM inside the kernel (K-grid over
    # taps / manual DMA of shifted windows) instead of host-side im2col.
    patches, Ho, Wo = im2col_3x3(o1, strides)
    M2 = N * Ho * Wo
    s2, b2 = fold_bn(params["bn2"])
    o2 = fused_matmul_bn(patches, params["w2"].reshape(9 * C, C),
                         s2 * gcs[1], b2 * gcs[1], relu=True,
                         out_dtype=jnp.bfloat16)

    # conv3 (1x1, BN) + shortcut + ReLU + mask gc3, fused into one kernel
    s3, b3 = fold_bn(params["bn3"])
    if strides != 1 or Cin != C4:
        ss, bs = fold_bn(params["bns"])
        xs = x[:, ::strides, ::strides, :].reshape(M2, Cin)
        o3 = fused_conv3_proj(o2, params["w3"], xs, params["ws"],
                              s3, b3, ss, bs, gcs[2], out_dtype=x.dtype)
    else:
        res = x.reshape(M2, C4)
        o3 = fused_conv3_res(o2, params["w3"], res, s3, b3, gcs[2],
                             out_dtype=x.dtype)

    out = o3.reshape(N, Ho, Wo, C4)
    return jnp.transpose(out, (0, 3, 1, 2))         # back to NCHW


# ----------------------------------------------------------------------------
# Pure-JAX reference (lax.conv, mirroring the bf16 operand quantization)
# ----------------------------------------------------------------------------
def reference_forward(x_nchw, params, masks, strides, masks_split):
    gcs = masks[masks_split[0]:masks_split[1]]
    N, Cin, H, W = x_nchw.shape
    C = params["w1"].shape[1]
    C4 = 4 * C
    x = jnp.transpose(x_nchw, (0, 2, 3, 1))
    dn = ("NHWC", "HWIO", "NHWC")

    def conv(inp, w, stride, padding):
        return lax.conv_general_dilated(
            inp.astype(jnp.bfloat16), w.astype(jnp.bfloat16),
            (stride, stride), padding, dimension_numbers=dn,
            preferred_element_type=jnp.float32)

    def bn(y, p):
        s, b = fold_bn(p)
        return y * s + b

    o = conv(x, params["w1"].reshape(1, 1, Cin, C), 1, "VALID")
    o = jnp.maximum(bn(o, params["bn1"]), 0.0) * gcs[0]
    o = o.astype(jnp.bfloat16).astype(jnp.float32)     # mirror bf16 storage
    o = conv(o, params["w2"], strides, ((1, 1), (1, 1)))
    o = jnp.maximum(bn(o, params["bn2"]), 0.0) * gcs[1]
    o = o.astype(jnp.bfloat16).astype(jnp.float32)     # mirror bf16 storage
    o = conv(o, params["w3"].reshape(1, 1, C, C4), 1, "VALID")
    o = bn(o, params["bn3"])
    if strides != 1 or Cin != C4:
        sc = conv(x, params["ws"].reshape(1, 1, Cin, C4), strides, "VALID")
        sc = bn(sc, params["bns"])
    else:
        sc = x
    o = jnp.maximum(o + sc, 0.0) * gcs[2]
    return jnp.transpose(o, (0, 3, 1, 2))


# ----------------------------------------------------------------------------
# Main
# ----------------------------------------------------------------------------
if __name__ == "__main__":
    key = jax.random.PRNGKey(0)
    keys = jax.random.split(key, 16)

    # Module hyper-params (small synthetic shapes).
    in_channels, out_channels, strides = 8, 4, 2
    num_tasks, masks_split = 3, [1, 4]
    N, H, W = 2, 8, 8

    def make_bn(k, c):
        k1, k2, k3, k4 = jax.random.split(k, 4)
        gamma = 0.5 + jax.random.uniform(k1, (c,), jnp.float32)
        beta = 0.1 * jax.random.normal(k2, (c,), jnp.float32)
        mean = 0.1 * jax.random.normal(k3, (c,), jnp.float32)
        var = 0.5 + jax.random.uniform(k4, (c,), jnp.float32)
        return (gamma, beta, mean, var)

    params = {
        # 1x1 conv weights stored as (Cin, Cout); 3x3 as HWIO (3,3,Cin,Cout)
        "w1": 0.1 * jax.random.normal(keys[0], (in_channels, out_channels), jnp.float32),
        "w2": 0.1 * jax.random.normal(keys[1], (3, 3, out_channels, out_channels), jnp.float32),
        "w3": 0.1 * jax.random.normal(keys[2], (out_channels, 4 * out_channels), jnp.float32),
        "ws": 0.1 * jax.random.normal(keys[3], (in_channels, 4 * out_channels), jnp.float32),
        "bn1": make_bn(keys[4], out_channels),
        "bn2": make_bn(keys[5], out_channels),
        "bn3": make_bn(keys[6], 4 * out_channels),
        "bns": make_bn(keys[7], 4 * out_channels),
    }

    # HAT masks: sigmoid(embedding) per channel; list indexed by masks_split.
    masks = [
        jax.nn.sigmoid(jax.random.normal(keys[8], (in_channels,), jnp.float32)),   # unused
        jax.nn.sigmoid(jax.random.normal(keys[9], (out_channels,), jnp.float32)),
        jax.nn.sigmoid(jax.random.normal(keys[10], (out_channels,), jnp.float32)),
        jax.nn.sigmoid(jax.random.normal(keys[11], (4 * out_channels,), jnp.float32)),
    ]

    x = jax.random.normal(keys[12], (N, in_channels, H, W), jnp.float32)

    out = bottleneck_forward(x, params, masks, strides, masks_split)
    out = jax.block_until_ready(out)

    ref = jax.block_until_ready(
        reference_forward(x, params, masks, strides, masks_split))

    np.testing.assert_allclose(np.asarray(out), np.asarray(ref),
                               rtol=1e-2, atol=5e-3)
    print("KERNEL_OK")
</pallas_src>

<mosaic_0001>
module attributes {stable_mosaic.version = 11 : i64} {
  func.func @_mm_bn_kernel(%arg0: i32, %arg1: i32, %arg2: i32, %arg3: memref<128x128xbf16, #tpu.memory_space<vmem>>, %arg4: memref<128x128xbf16, #tpu.memory_space<vmem>>, %arg5: memref<1x128xf32, #tpu.memory_space<vmem>>, %arg6: memref<1x128xf32, #tpu.memory_space<vmem>>, %arg7: memref<128x128xbf16, #tpu.memory_space<vmem>>, %arg8: memref<128x128xf32, #tpu.memory_space<vmem>>) attributes {dimension_semantics = [#tpu.dimension_semantics<parallel>, #tpu.dimension_semantics<parallel>, #tpu.dimension_semantics<arbitrary>], iteration_bounds = array<i64: 1, 1, 1>, scalar_prefetch = 0 : i64, scratch_operands = 1 : i64, tpu.core_type = #tpu.core_type<tc>, window_params = [{transform_indices = @transform_0, window_bounds = array<i64: 128, 128>}, {transform_indices = @transform_1, window_bounds = array<i64: 128, 128>}, {transform_indices = @transform_2, window_bounds = array<i64: 1, 128>}, {transform_indices = @transform_3, window_bounds = array<i64: 1, 128>}, {transform_indices = @transform_4, window_bounds = array<i64: 128, 128>}]} {
    %c0_i32 = arith.constant 0 : i32
    %0 = arith.cmpi eq, %arg2, %c0_i32 : i32
    %1 = arith.extui %0 : i1 to i32
    %c0_i32_0 = arith.constant 0 : i32
    %2 = arith.cmpi ne, %1, %c0_i32_0 : i32
    scf.if %2 {
      %cst_10 = arith.constant 0.000000e+00 : f32
      %12 = vector.broadcast %cst_10 : f32 to vector<128x128xf32>
      %c0_11 = arith.constant 0 : index
      %c0_12 = arith.constant 0 : index
      %13 = vector.load %arg8[%c0_11, %c0_12] : memref<128x128xf32, #tpu.memory_space<vmem>>, vector<128x128xf32>
      tpu.vector_store %arg8[%c0_11, %c0_12], %12 {strides = array<i32>} : memref<128x128xf32, #tpu.memory_space<vmem>>, vector<128x128xf32>,
    } else {
    }
    %c0 = arith.constant 0 : index
    %c0_1 = arith.constant 0 : index
    %3 = vector.load %arg8[%c0, %c0_1] : memref<128x128xf32, #tpu.memory_space<vmem>>, vector<128x128xf32>
    %c0_2 = arith.constant 0 : index
    %c0_3 = arith.constant 0 : index
    %4 = vector.load %arg3[%c0_2, %c0_3] : memref<128x128xbf16, #tpu.memory_space<vmem>>, vector<128x128xbf16>
    %c0_4 = arith.constant 0 : index
    %c0_5 = arith.constant 0 : index
    %5 = vector.load %arg4[%c0_4, %c0_5] : memref<128x128xbf16, #tpu.memory_space<vmem>>, vector<128x128xbf16>
    %cst = arith.constant dense<0.000000e+00> : vector<128x128xf32>
    %6 = tpu.matmul %4, %5, %cst {dimension_numbers = #tpu.dot_dimension_numbers<[1], [0], [0], [1], [0, 0, 1, 1], [], []>} : vector<128x128xbf16>, vector<128x128xbf16>, vector<128x128xf32> -> vector<128x128xf32>
    %7 = arith.addf %3, %6 : vector<128x128xf32>
    %c0_6 = arith.constant 0 : index
    %c0_7 = arith.constant 0 : index
    %8 = vector.load %arg8[%c0_6, %c0_7] : memref<128x128xf32, #tpu.memory_space<vmem>>, vector<128x128xf32>
    tpu.vector_store %arg8[%c0_6, %c0_7], %7 {strides = array<i32>} : memref<128x128xf32, #tpu.memory_space<vmem>>, vector<128x128xf32>,
    %c0_i32_8 = arith.constant 0 : i32
    %9 = arith.cmpi eq, %arg2, %c0_i32_8 : i32
    %10 = arith.extui %9 : i1 to i32
    %c0_i32_9 = arith.constant 0 : i32
    %11 = arith.cmpi ne, %10, %c0_i32_9 : i32
    scf.if %11 {
      %c0_10 = arith.constant 0 : index
      %c0_11 = arith.constant 0 : index
      %12 = vector.load %arg8[%c0_10, %c0_11] : memref<128x128xf32, #tpu.memory_space<vmem>>, vector<128x128xf32>
      %c0_12 = arith.constant 0 : index
      %c0_13 = arith.constant 0 : index
      %13 = vector.load %arg5[%c0_12, %c0_13] : memref<1x128xf32, #tpu.memory_space<vmem>>, vector<1x128xf32>
      %14 = vector.broadcast %13 : vector<1x128xf32> to vector<128x128xf32>
      %15 = arith.mulf %12, %14 : vector<128x128xf32>
      %c0_14 = arith.constant 0 : index
      %c0_15 = arith.constant 0 : index
      %16 = vector.load %arg6[%c0_14, %c0_15] : memref<1x128xf32, #tpu.memory_space<vmem>>, vector<1x128xf32>
      %17 = vector.broadcast %16 : vector<1x128xf32> to vector<128x128xf32>
      %18 = arith.addf %15, %17 : vector<128x128xf32>
      %cst_16 = arith.constant 0.000000e+00 : f32
      %19 = vector.broadcast %cst_16 : f32 to vector<128x128xf32>
      %20 = arith.maximumf %18, %19 : vector<128x128xf32>
      %21 = arith.truncf %20 : vector<128x128xf32> to vector<128x128xbf16>
      %c0_17 = arith.constant 0 : index
      %c0_18 = arith.constant 0 : index
      %22 = vector.load %arg7[%c0_17, %c0_18] : memref<128x128xbf16, #tpu.memory_space<vmem>>, vector<128x128xbf16>
      tpu.vector_store %arg7[%c0_17, %c0_18], %21 {strides = array<i32>} : memref<128x128xbf16, #tpu.memory_space<vmem>>, vector<128x128xbf16>,
    } else {
    }
    return
  }
  func.func @transform_0(%arg0: i32, %arg1: i32, %arg2: i32) -> (i32, i32) {
    %c0_i32 = arith.constant 0 : i32
    return %arg0, %arg2 : i32, i32
  }
  func.func @transform_1(%arg0: i32, %arg1: i32, %arg2: i32) -> (i32, i32) {
    %c0_i32 = arith.constant 0 : i32
    return %arg2, %arg1 : i32, i32
  }
  func.func @transform_2(%arg0: i32, %arg1: i32, %arg2: i32) -> (i32, i32) {
    %c0_i32 = arith.constant 0 : i32
    %c0_i32_0 = arith.constant 0 : i32
    return %c0_i32, %arg1 : i32, i32
  }
  func.func @transform_3(%arg0: i32, %arg1: i32, %arg2: i32) -> (i32, i32) {
    %c0_i32 = arith.constant 0 : i32
    %c0_i32_0 = arith.constant 0 : i32
    return %c0_i32, %arg1 : i32, i32
  }
  func.func @transform_4(%arg0: i32, %arg1: i32, %arg2: i32) -> (i32, i32) {
    %c0_i32 = arith.constant 0 : i32
    return %arg0, %arg1 : i32, i32
  }
}

</mosaic_0001>

<llo_original>
// kernel: tpu_custom_call.1
$region0: #{tpu_custom_call.1}
  #allocation0 [shape = 'u32[]', space=smem, size = 0x4, offset = 0x4, fixed_abs, tag = 'smem constant byte address 0x4 - core index']
  #allocation1 [shape = 'u32[144,128]{1,0:T(1,128)}', space=vmem, size = 0x12000, scoped, tag = 'internal scratch']
  #allocation2 [shape = 'f32[128,128]{1,0:T(8,128)}', space=vmem, size = 0x10000, scoped, tag = 'scratch operand']
  %s0 = inlined_call_operand.hbm [shape: bf16[128,128], index: 0, kind: input, shape index: {}]
  %s1 = inlined_call_operand.hbm [shape: bf16[128,128], index: 1, kind: input, shape index: {}]
  %s2 = inlined_call_operand.vmem [shape: f32[1,128], index: 2, kind: input, shape index: {}]
  %s3 = inlined_call_operand.vmem [shape: f32[1,128], index: 3, kind: input, shape index: {}]
  %s4 = inlined_call_operand.hbm [shape: bf16[128,128], index: 4, kind: output, shape index: {}]
  %s5 = sld [smem:[#allocation0]]
  $region42: #{tpu_custom_call.1} parent=0
    _
  %s7 = ssub.s32 1, %s5
  %s8 = scalar_select 0, %s7, %s5
  $region1: #{tpu_custom_call.1} parent=0
    #allocation3 [shape = 'u8[32768]{0}', space=vmem, size = 0x8000, scoped, tag = 'input window, operand 0, single buffered']
    #allocation4 [shape = 's32[1]{0}', space=sflag, size = 0x4, scoped, tag = 'scoped memory for tpu_custom_call.1']
    #allocation5 [shape = 's32[1]{0}', space=sflag, size = 0x4, scoped, tag = 'scoped memory for tpu_custom_call.1']
    #allocation6 [shape = 'u8[32768]{0}', space=vmem, size = 0x8000, scoped, tag = 'input window, operand 1, single buffered']
    #allocation7 [shape = 's32[1]{0}', space=sflag, size = 0x4, scoped, tag = 'scoped memory for tpu_custom_call.1']
    #allocation8 [shape = 'u8[32768]{0}', space=vmem, size = 0x8000, scoped, tag = 'output window, operand 0, single buffered']
    %9 = vsyncpa [#allocation4], 0
    %10 = vsyncpa [#allocation7], 0
    %11 = vsyncpa [#allocation5], 0
    // Predicated region
    $region2: #{tpu_custom_call.1} parent=1 // pred_check
      _
    $region3: #{tpu_custom_call.1} parent=1 // pred_check_branch
      %13 = sbr.rel (0) target = $region5
    $region4: #{tpu_custom_call.1} parent=1 // pred_region
      %s15 = ssub.s32 1024, 1024
      %16 = vsyncadd [#allocation4], %s15
      %s17 = sshll.u32 [#allocation3], 4
      %s18 = int_to_ptr.vmem [resolvable:$true] %s17
      %23 = dma.hbm_to_vmem [thread:$0]  %s0, 1024, %s18, [#allocation4], 64, 64, 4
    $region5: #{tpu_custom_call.1} parent=1 // pred_fallthru
      _
    // Predicated region
    $region6: #{tpu_custom_call.1} parent=1 // pred_check
      _
    $region7: #{tpu_custom_call.1} parent=1 // pred_check_branch
      %25 = sbr.rel (0) target = $region9
    $region8: #{tpu_custom_call.1} parent=1 // pred_region
      %s27 = ssub.s32 1024, 1024
      %28 = vsyncadd [#allocation7], %s27
      %s29 = sshll.u32 [#allocation6], 4
      %s30 = int_to_ptr.vmem [resolvable:$true] %s29
      %35 = dma.hbm_to_vmem [thread:$0]  %s1, 1024, %s30, [#allocation7], 64, 64, 4
    $region9: #{tpu_custom_call.1} parent=1 // pred_fallthru
      _
    // Predicated region
    $region10: #{tpu_custom_call.1} parent=1 // pred_check
      _
    $region11: #{tpu_custom_call.1} parent=1 // pred_check_branch
      %37 = sbr.rel (0) target = $region13
    $region12: #{tpu_custom_call.1} parent=1 // pred_region
      _
    $region13: #{tpu_custom_call.1} parent=1 // pred_fallthru
      _
    // Predicated region
    $region14: #{tpu_custom_call.1} parent=1 // pred_check
      _
    $region15: #{tpu_custom_call.1} parent=1 // pred_check_branch
      %39 = sbr.rel (0) target = $region17
    $region16: #{tpu_custom_call.1} parent=1 // pred_region
      _
    $region17: #{tpu_custom_call.1} parent=1 // pred_fallthru
      _
    // Predicated region
    $region18: #{tpu_custom_call.1} parent=1 // pred_check
      _
    $region19: #{tpu_custom_call.1} parent=1 // pred_check_branch
      %41 = sbr.rel (0) target = $region21
    $region20: #{tpu_custom_call.1} parent=1 // pred_region
      %42 = dma.done [#allocation4], 1024
    $region21: #{tpu_custom_call.1} parent=1 // pred_fallthru
      _
    // Predicated region
    $region22: #{tpu_custom_call.1} parent=1 // pred_check
      _
    $region23: #{tpu_custom_call.1} parent=1 // pred_check_branch
      %44 = sbr.rel (0) target = $region25
    $region24: #{tpu_custom_call.1} parent=1 // pred_region
      %45 = dma.done [#allocation7], 1024
    $region25: #{tpu_custom_call.1} parent=1 // pred_fallthru
      _
    %p47 = scmp.eq.s32.totalorder 0, 0
    // Predicated region
    $region26: #{tpu_custom_call.1} parent=1 // pred_check
      %p48 = pneg %p47
    $region27: #{tpu_custom_call.1} parent=1 // pred_check_branch
      %50 = sbr.rel (%p48) target = $region29
    $region28: #{tpu_custom_call.1} parent=1 // pred_region
      %51 = vst [vmem:[#allocation2] sm:$0xff] 0.0
      %52 = vst [vmem:[#allocation2 + $0x8] sm:$0xff] 0.0
      %53 = vst [vmem:[#allocation2 + $0x10] sm:$0xff] 0.0
      %54 = vst [vmem:[#allocation2 + $0x18] sm:$0xff] 0.0
      %55 = vst [vmem:[#allocation2 + $0x20] sm:$0xff] 0.0
      %56 = vst [vmem:[#allocation2 + $0x28] sm:$0xff] 0.0
      %57 = vst [vmem:[#allocation2 + $0x30] sm:$0xff] 0.0
      %58 = vst [vmem:[#allocation2 + $0x38] sm:$0xff] 0.0
      %59 = vst [vmem:[#allocation2 + $0x40] sm:$0xff] 0.0
      %60 = vst [vmem:[#allocation2 + $0x48] sm:$0xff] 0.0
      %61 = vst [vmem:[#allocation2 + $0x50] sm:$0xff] 0.0
      %62 = vst [vmem:[#allocation2 + $0x58] sm:$0xff] 0.0
      %63 = vst [vmem:[#allocation2 + $0x60] sm:$0xff] 0.0
      %64 = vst [vmem:[#allocation2 + $0x68] sm:$0xff] 0.0
      %65 = vst [vmem:[#allocation2 + $0x70] sm:$0xff] 0.0
      %66 = vst [vmem:[#allocation2 + $0x78] sm:$0xff] 0.0
    $region29: #{tpu_custom_call.1} parent=1 // pred_fallthru
      _
    %v67 = vld [vmem:[#allocation2] sm:$0xff]
    %v68 = vld [vmem:[#allocation2 + $0x8] sm:$0xff]
    %v69 = vld [vmem:[#allocation2 + $0x10] sm:$0xff]
    %v70 = vld [vmem:[#allocation2 + $0x18] sm:$0xff]
    %v71 = vld [vmem:[#allocation2 + $0x20] sm:$0xff]
    %v72 = vld [vmem:[#allocation2 + $0x28] sm:$0xff]
    %v73 = vld [vmem:[#allocation2 + $0x30] sm:$0xff]
    %v74 = vld [vmem:[#allocation2 + $0x38] sm:$0xff]
    %v75 = vld [vmem:[#allocation2 + $0x40] sm:$0xff]
    %v76 = vld [vmem:[#allocation2 + $0x48] sm:$0xff]
    %v77 = vld [vmem:[#allocation2 + $0x50] sm:$0xff]
    %v78 = vld [vmem:[#allocation2 + $0x58] sm:$0xff]
    %v79 = vld [vmem:[#allocation2 + $0x60] sm:$0xff]
    %v80 = vld [vmem:[#allocation2 + $0x68] sm:$0xff]
    %v81 = vld [vmem:[#allocation2 + $0x70] sm:$0xff]
    %v82 = vld [vmem:[#allocation2 + $0x78] sm:$0xff]
    %v83 = vld [vmem:[#allocation3] sm:$0xf]
    %v84 = vld [vmem:[#allocation3 + $0x4] sm:$0xf]
    %v85 = vld [vmem:[#allocation3 + $0x8] sm:$0xf]
    %v86 = vld [vmem:[#allocation3 + $0xc] sm:$0xf]
    %v87 = vld [vmem:[#allocation3 + $0x10] sm:$0xf]
    %v88 = vld [vmem:[#allocation3 + $0x14] sm:$0xf]
    %v89 = vld [vmem:[#allocation3 + $0x18] sm:$0xf]
    %v90 = vld [vmem:[#allocation3 + $0x1c] sm:$0xf]
    %v91 = vld [vmem:[#allocation3 + $0x20] sm:$0xf]
    %v92 = vld [vmem:[#allocation3 + $0x24] sm:$0xf]
    %v93 = vld [vmem:[#allocation3 + $0x28] sm:$0xf]
    %v94 = vld [vmem:[#allocation3 + $0x2c] sm:$0xf]
    %v95 = vld [vmem:[#allocation3 + $0x30] sm:$0xf]
    %v96 = vld [vmem:[#allocation3 + $0x34] sm:$0xf]
    %v97 = vld [vmem:[#allocation3 + $0x38] sm:$0xf]
    %v98 = vld [vmem:[#allocation3 + $0x3c] sm:$0xf]
    %v99 = vld [vmem:[#allocation6] sm:$0xf]
    %v100 = vld [vmem:[#allocation6 + $0x4] sm:$0xf]
    %v101 = vld [vmem:[#allocation6 + $0x8] sm:$0xf]
    %v102 = vld [vmem:[#allocation6 + $0xc] sm:$0xf]
    %v103 = vld [vmem:[#allocation6 + $0x10] sm:$0xf]
    %v104 = vld [vmem:[#allocation6 + $0x14] sm:$0xf]
    %v105 = vld [vmem:[#allocation6 + $0x18] sm:$0xf]
    %v106 = vld [vmem:[#allocation6 + $0x1c] sm:$0xf]
    %v107 = vld [vmem:[#allocation6 + $0x20] sm:$0xf]
    %v108 = vld [vmem:[#allocation6 + $0x24] sm:$0xf]
    %v109 = vld [vmem:[#allocation6 + $0x28] sm:$0xf]
    %v110 = vld [vmem:[#allocation6 + $0x2c] sm:$0xf]
    %v111 = vld [vmem:[#allocation6 + $0x30] sm:$0xf]
    %v112 = vld [vmem:[#allocation6 + $0x34] sm:$0xf]
    %v113 = vld [vmem:[#allocation6 + $0x38] sm:$0xf]
    %v114 = vld [vmem:[#allocation6 + $0x3c] sm:$0xf]
    %v131 = vunpack.c.l.b16 %v83
    %v132 = vunpack.c.l.b16 %v84
    %v133 = vunpack.c.l.b16 %v85
    %v134 = vunpack.c.l.b16 %v86
    %v135 = vunpack.c.l.b16 %v87
    %v136 = vunpack.c.l.b16 %v88
    %v137 = vunpack.c.l.b16 %v89
    %v138 = vunpack.c.l.b16 %v90
    %v139 = vunpack.c.l.b16 %v91
    %v140 = vunpack.c.l.b16 %v92
    %v141 = vunpack.c.l.b16 %v93
    %v142 = vunpack.c.l.b16 %v94
    %v143 = vunpack.c.l.b16 %v95
    %v144 = vunpack.c.l.b16 %v96
    %v145 = vunpack.c.l.b16 %v97
    %v146 = vunpack.c.l.b16 %v98
    %v147 = vpack.c.b16 %v132, %v131
    %v148 = vpack.c.b16 %v134, %v133
    %v149 = vpack.c.b16 %v136, %v135
    %v150 = vpack.c.b16 %v138, %v137
    %v151 = vpack.c.b16 %v140, %v139
    %v152 = vpack.c.b16 %v142, %v141
    %v153 = vpack.c.b16 %v144, %v143
    %v154 = vpack.c.b16 %v146, %v145
    %v179 = vunpack.c.l.b16 %v99
    %v180 = vunpack.c.l.b16 %v100
    %v181 = vunpack.c.l.b16 %v101
    %v182 = vunpack.c.l.b16 %v102
    %v183 = vunpack.c.l.b16 %v103
    %v184 = vunpack.c.l.b16 %v104
    %v185 = vunpack.c.l.b16 %v105
    %v186 = vunpack.c.l.b16 %v106
    %v187 = vunpack.c.l.b16 %v107
    %v188 = vunpack.c.l.b16 %v108
    %v189 = vunpack.c.l.b16 %v109
    %v190 = vunpack.c.l.b16 %v110
    %v191 = vunpack.c.l.b16 %v111
    %v192 = vunpack.c.l.b16 %v112
    %v193 = vunpack.c.l.b16 %v113
    %v194 = vunpack.c.l.b16 %v114
    %v195 = vpack.c.b16 %v180, %v179
    %v196 = vpack.c.b16 %v182, %v181
    %v197 = vpack.c.b16 %v184, %v183
    %v198 = vpack.c.b16 %v186, %v185
    %v199 = vpack.c.b16 %v188, %v187
    %v200 = vpack.c.b16 %v190, %v189
    %v201 = vpack.c.b16 %v192, %v191
    %v202 = vpack.c.b16 %v194, %v193
    %211 = vmatprep.subr.bf16.mxu0 0
    %212 = vmatpush1.bf16.msra.mxu0 %v195
    %213 = vmatprep.subr.bf16.mxu0 0
    %214 = vmatpush1.bf16.msra.mxu0 %v196
    %215 = vmatprep.subr.bf16.mxu0 0
    %216 = vmatpush1.bf16.msra.mxu0 %v197
    %217 = vmatprep.subr.bf16.mxu0 0
    %218 = vmatpush1.bf16.msra.mxu0 %v198
    %219 = vmatprep.subr.bf16.mxu0 0
    %220 = vmatpush1.bf16.msra.mxu0 %v199
    %221 = vmatprep.subr.bf16.mxu0 0
    %222 = vmatpush1.bf16.msra.mxu0 %v200
    %223 = vmatprep.subr.bf16.mxu0 0
    %224 = vmatpush1.bf16.msra.mxu0 %v201
    %225 = vmatprep.subr.bf16.mxu0 0
    %226 = vmatpush1.bf16.msra.mxu0 %v202
    %227 = vmatprep.subr.bf16.mxu0 0
    %228 = vmatpush1.bf16.msra.mxu0 0
    %229 = vmatprep.subr.bf16.mxu0 0
    %230 = vmatpush1.bf16.msra.mxu0 0
    %231 = vmatprep.subr.bf16.mxu0 0
    %232 = vmatpush1.bf16.msra.mxu0 0
    %233 = vmatprep.subr.bf16.mxu0 0
    %234 = vmatpush1.bf16.msra.mxu0 0
    %235 = vmatprep.subr.bf16.mxu0 0
    %236 = vmatpush1.bf16.msra.mxu0 0
    %237 = vmatprep.subr.bf16.mxu0 0
    %238 = vmatpush1.bf16.msra.mxu0 0
    %239 = vmatprep.subr.bf16.mxu0 0
    %240 = vmatpush1.bf16.msra.mxu0 0
    %241 = vmatprep.subr.bf16.mxu0 0
    %242 = vmatpush1.bf16.msra.mxu0 0
    %243 = vmatprep.mubr.bf16.mxu0 0
    %244 = vmatmul.mubr.bf16.gmra.mrb[0].mxu0 %v147
    %v245 = vpop.f32.mrb[0].mxu0
    %v246 = vadd.f32 0.0, %v245
    %v247 = vpop.f32.mrb[0].mxu0
    %v248 = vpop.f32.mrb[0].mxu0
    %v249 = vadd.f32 0.0, %v248
    %v250 = vpop.f32.mrb[0].mxu0
    %251 = vmatprep.mubr.bf16.mxu0 0
    %252 = vmatmul.mubr.bf16.gmra.mrb[0].mxu0 %v148
    %v253 = vpop.f32.mrb[0].mxu0
    %v254 = vadd.f32 0.0, %v253
    %v255 = vpop.f32.mrb[0].mxu0
    %v256 = vpop.f32.mrb[0].mxu0
    %v257 = vadd.f32 0.0, %v256
    %v258 = vpop.f32.mrb[0].mxu0
    %259 = vmatprep.mubr.bf16.mxu0 0
    %260 = vmatmul.mubr.bf16.gmra.mrb[0].mxu0 %v149
    %v261 = vpop.f32.mrb[0].mxu0
    %v262 = vadd.f32 0.0, %v261
    %v263 = vpop.f32.mrb[0].mxu0
    %v264 = vpop.f32.mrb[0].mxu0
    %v265 = vadd.f32 0.0, %v264
    %v266 = vpop.f32.mrb[0].mxu0
    %267 = vmatprep.mubr.bf16.mxu0 0
    %268 = vmatmul.mubr.bf16.gmra.mrb[0].mxu0 %v150
    %v269 = vpop.f32.mrb[0].mxu0
    %v270 = vadd.f32 0.0, %v269
    %v271 = vpop.f32.mrb[0].mxu0
    %v272 = vpop.f32.mrb[0].mxu0
    %v273 = vadd.f32 0.0, %v272
    %v274 = vpop.f32.mrb[0].mxu0
    %275 = vmatprep.mubr.bf16.mxu0 0
    %276 = vmatmul.mubr.bf16.gmra.mrb[0].mxu0 %v151
    %v277 = vpop.f32.mrb[0].mxu0
    %v278 = vadd.f32 0.0, %v277
    %v279 = vpop.f32.mrb[0].mxu0
    %v280 = vpop.f32.mrb[0].mxu0
    %v281 = vadd.f32 0.0, %v280
    %v282 = vpop.f32.mrb[0].mxu0
    %283 = vmatprep.mubr.bf16.mxu0 0
    %284 = vmatmul.mubr.bf16.gmra.mrb[0].mxu0 %v152
    %v285 = vpop.f32.mrb[0].mxu0
    %v286 = vadd.f32 0.0, %v285
    %v287 = vpop.f32.mrb[0].mxu0
    %v288 = vpop.f32.mrb[0].mxu0
    %v289 = vadd.f32 0.0, %v288
    %v290 = vpop.f32.mrb[0].mxu0
    %291 = vmatprep.mubr.bf16.mxu0 0
    %292 = vmatmul.mubr.bf16.gmra.mrb[0].mxu0 %v153
    %v293 = vpop.f32.mrb[0].mxu0
    %v294 = vadd.f32 0.0, %v293
    %v295 = vpop.f32.mrb[0].mxu0
    %v296 = vpop.f32.mrb[0].mxu0
    %v297 = vadd.f32 0.0, %v296
    %v298 = vpop.f32.mrb[0].mxu0
    %299 = vmatprep.mubr.bf16.mxu0 0
    %300 = vmatmul.mubr.bf16.gmra.mrb[0].mxu0 %v154
    %v301 = vpop.f32.mrb[0].mxu0
    %v302 = vadd.f32 0.0, %v301
    %v303 = vpop.f32.mrb[0].mxu0
    %v304 = vpop.f32.mrb[0].mxu0
    %v305 = vadd.f32 0.0, %v304
    %v306 = vpop.f32.mrb[0].mxu0
    %307 = vdwg.mxu0
    %v308 = vadd.f32 %v67, %v246
    %v309 = vadd.f32 %v68, %v249
    %v310 = vadd.f32 %v69, %v254
    %v311 = vadd.f32 %v70, %v257
    %v312 = vadd.f32 %v71, %v262
    %v313 = vadd.f32 %v72, %v265
    %v314 = vadd.f32 %v73, %v270
    %v315 = vadd.f32 %v74, %v273
    %v316 = vadd.f32 %v75, %v278
    %v317 = vadd.f32 %v76, %v281
    %v318 = vadd.f32 %v77, %v286
    %v319 = vadd.f32 %v78, %v289
    %v320 = vadd.f32 %v79, %v294
    %v321 = vadd.f32 %v80, %v297
    %v322 = vadd.f32 %v81, %v302
    %v323 = vadd.f32 %v82, %v305
    %324 = vst [vmem:[#allocation2] sm:$0xff] %v308
    %325 = vst [vmem:[#allocation2 + $0x8] sm:$0xff] %v309
    %326 = vst [vmem:[#allocation2 + $0x10] sm:$0xff] %v310
    %327 = vst [vmem:[#allocation2 + $0x18] sm:$0xff] %v311
    %328 = vst [vmem:[#allocation2 + $0x20] sm:$0xff] %v312
    %329 = vst [vmem:[#allocation2 + $0x28] sm:$0xff] %v313
    %330 = vst [vmem:[#allocation2 + $0x30] sm:$0xff] %v314
    %331 = vst [vmem:[#allocation2 + $0x38] sm:$0xff] %v315
    %332 = vst [vmem:[#allocation2 + $0x40] sm:$0xff] %v316
    %333 = vst [vmem:[#allocation2 + $0x48] sm:$0xff] %v317
    %334 = vst [vmem:[#allocation2 + $0x50] sm:$0xff] %v318
    %335 = vst [vmem:[#allocation2 + $0x58] sm:$0xff] %v319
    %336 = vst [vmem:[#allocation2 + $0x60] sm:$0xff] %v320
    %337 = vst [vmem:[#allocation2 + $0x68] sm:$0xff] %v321
    %338 = vst [vmem:[#allocation2 + $0x70] sm:$0xff] %v322
    %339 = vst [vmem:[#allocation2 + $0x78] sm:$0xff] %v323
    // Predicated region
    $region30: #{tpu_custom_call.1} parent=1 // pred_check
      %p340 = pneg %p47
    $region31: #{tpu_custom_call.1} parent=1 // pred_check_branch
      %342 = sbr.rel (%p340) target = $region33
    $region32: #{tpu_custom_call.1} parent=1 // pred_region
      %v343 = vld [vmem:[#allocation2] sm:$0xff]
      %v344 = vld [vmem:[#allocation2 + $0x8] sm:$0xff]
      %v345 = vld [vmem:[#allocation2 + $0x10] sm:$0xff]
      %v346 = vld [vmem:[#allocation2 + $0x18] sm:$0xff]
      %v347 = vld [vmem:[#allocation2 + $0x20] sm:$0xff]
      %v348 = vld [vmem:[#allocation2 + $0x28] sm:$0xff]
      %v349 = vld [vmem:[#allocation2 + $0x30] sm:$0xff]
      %v350 = vld [vmem:[#allocation2 + $0x38] sm:$0xff]
      %v351 = vld [vmem:[#allocation2 + $0x40] sm:$0xff]
      %v352 = vld [vmem:[#allocation2 + $0x48] sm:$0xff]
      %v353 = vld [vmem:[#allocation2 + $0x50] sm:$0xff]
      %v354 = vld [vmem:[#allocation2 + $0x58] sm:$0xff]
      %v355 = vld [vmem:[#allocation2 + $0x60] sm:$0xff]
      %v356 = vld [vmem:[#allocation2 + $0x68] sm:$0xff]
      %v357 = vld [vmem:[#allocation2 + $0x70] sm:$0xff]
      %v358 = vld [vmem:[#allocation2 + $0x78] sm:$0xff]
      %v359 = vld [vmem:[%s2] sm:$0x1]
      %v361 = vlaneseq
      %v362 = vshrl.u32 %v361, 7
      %v363 = vsub.s32 0, %v362
      %v364 = vrot.slane %v359, %v363
      %v366 = vmul.f32 %v343, %v364
      %v367 = vmul.f32 %v344, %v364
      %v368 = vmul.f32 %v345, %v364
      %v369 = vmul.f32 %v346, %v364
      %v370 = vmul.f32 %v347, %v364
      %v371 = vmul.f32 %v348, %v364
      %v372 = vmul.f32 %v349, %v364
      %v373 = vmul.f32 %v350, %v364
      %v374 = vmul.f32 %v351, %v364
      %v375 = vmul.f32 %v352, %v364
      %v376 = vmul.f32 %v353, %v364
      %v377 = vmul.f32 %v354, %v364
      %v378 = vmul.f32 %v355, %v364
      %v379 = vmul.f32 %v356, %v364
      %v380 = vmul.f32 %v357, %v364
      %v381 = vmul.f32 %v358, %v364
      %v382 = vld [vmem:[%s3] sm:$0x1]
      %v384 = vlaneseq
      %v385 = vshrl.u32 %v384, 7
      %v386 = vsub.s32 0, %v385
      %v387 = vrot.slane %v382, %v386
      %v389 = vadd.f32 %v366, %v387
      %v390 = vadd.f32 %v367, %v387
      %v391 = vadd.f32 %v368, %v387
      %v392 = vadd.f32 %v369, %v387
      %v393 = vadd.f32 %v370, %v387
      %v394 = vadd.f32 %v371, %v387
      %v395 = vadd.f32 %v372, %v387
      %v396 = vadd.f32 %v373, %v387
      %v397 = vadd.f32 %v374, %v387
      %v398 = vadd.f32 %v375, %v387
      %v399 = vadd.f32 %v376, %v387
      %v400 = vadd.f32 %v377, %v387
      %v401 = vadd.f32 %v378, %v387
      %v402 = vadd.f32 %v379, %v387
      %v403 = vadd.f32 %v380, %v387
      %v404 = vadd.f32 %v381, %v387
      %v405 = vmax.f32 %v389, 0.0
      %v406 = vmax.f32 %v390, 0.0
      %v407 = vmax.f32 %v391, 0.0
      %v408 = vmax.f32 %v392, 0.0
      %v409 = vmax.f32 %v393, 0.0
      %v410 = vmax.f32 %v394, 0.0
      %v411 = vmax.f32 %v395, 0.0
      %v412 = vmax.f32 %v396, 0.0
      %v413 = vmax.f32 %v397, 0.0
      %v414 = vmax.f32 %v398, 0.0
      %v415 = vmax.f32 %v399, 0.0
      %v416 = vmax.f32 %v400, 0.0
      %v417 = vmax.f32 %v401, 0.0
      %v418 = vmax.f32 %v402, 0.0
      %v419 = vmax.f32 %v403, 0.0
      %v420 = vmax.f32 %v404, 0.0
      %v421 = vpack.c.bf16 %v406, %v405
      %v422 = vpack.c.bf16 %v408, %v407
      %v423 = vpack.c.bf16 %v410, %v409
      %v424 = vpack.c.bf16 %v412, %v411
      %v425 = vpack.c.bf16 %v414, %v413
      %v426 = vpack.c.bf16 %v416, %v415
      %v427 = vpack.c.bf16 %v418, %v417
      %v428 = vpack.c.bf16 %v420, %v419
      %v437 = vunpack.c.l.b16 %v421
      %v438 = vunpack.c.h.b16 %v421
      %v439 = vunpack.c.l.b16 %v422
      %v440 = vunpack.c.h.b16 %v422
      %v441 = vunpack.c.l.b16 %v423
      %v442 = vunpack.c.h.b16 %v423
      %v443 = vunpack.c.l.b16 %v424
      %v444 = vunpack.c.h.b16 %v424
      %v445 = vunpack.c.l.b16 %v425
      %v446 = vunpack.c.h.b16 %v425
      %v447 = vunpack.c.l.b16 %v426
      %v448 = vunpack.c.h.b16 %v426
      %v449 = vunpack.c.l.b16 %v427
      %v450 = vunpack.c.h.b16 %v427
      %v451 = vunpack.c.l.b16 %v428
      %v452 = vunpack.c.h.b16 %v428
      %v453 = vpack.c.b16 %v437, %v437
      %v454 = vpack.c.b16 %v438, %v438
      %v455 = vpack.c.b16 %v439, %v439
      %v456 = vpack.c.b16 %v440, %v440
      %v457 = vpack.c.b16 %v441, %v441
      %v458 = vpack.c.b16 %v442, %v442
      %v459 = vpack.c.b16 %v443, %v443
      %v460 = vpack.c.b16 %v444, %v444
      %v461 = vpack.c.b16 %v445, %v445
      %v462 = vpack.c.b16 %v446, %v446
      %v463 = vpack.c.b16 %v447, %v447
      %v464 = vpack.c.b16 %v448, %v448
      %v465 = vpack.c.b16 %v449, %v449
      %v466 = vpack.c.b16 %v450, %v450
      %v467 = vpack.c.b16 %v451, %v451
      %v468 = vpack.c.b16 %v452, %v452
      %485 = vst [vmem:[#allocation8] sm:$0xf] %v453
      %486 = vst [vmem:[#allocation8 + $0x4] sm:$0xf] %v454
      %487 = vst [vmem:[#allocation8 + $0x8] sm:$0xf] %v455
      %488 = vst [vmem:[#allocation8 + $0xc] sm:$0xf] %v456
      %489 = vst [vmem:[#allocation8 + $0x10] sm:$0xf] %v457
      %490 = vst [vmem:[#allocation8 + $0x14] sm:$0xf] %v458
      %491 = vst [vmem:[#allocation8 + $0x18] sm:$0xf] %v459
      %492 = vst [vmem:[#allocation8 + $0x1c] sm:$0xf] %v460
      %493 = vst [vmem:[#allocation8 + $0x20] sm:$0xf] %v461
      %494 = vst [vmem:[#allocation8 + $0x24] sm:$0xf] %v462
      %495 = vst [vmem:[#allocation8 + $0x28] sm:$0xf] %v463
      %496 = vst [vmem:[#allocation8 + $0x2c] sm:$0xf] %v464
      %497 = vst [vmem:[#allocation8 + $0x30] sm:$0xf] %v465
      %498 = vst [vmem:[#allocation8 + $0x34] sm:$0xf] %v466
      %499 = vst [vmem:[#allocation8 + $0x38] sm:$0xf] %v467
      %500 = vst [vmem:[#allocation8 + $0x3c] sm:$0xf] %v468
    $region33: #{tpu_custom_call.1} parent=1 // pred_fallthru
      _
    // Predicated region
    $region34: #{tpu_custom_call.1} parent=1 // pred_check
      _
    $region35: #{tpu_custom_call.1} parent=1 // pred_check_branch
      %502 = sbr.rel (0) target = $region37
    $region36: #{tpu_custom_call.1} parent=1 // pred_region
      %s504 = ssub.s32 1024, 1024
      %505 = vsyncadd [#allocation5], %s504
      %s506 = sshll.u32 [#allocation8], 4
      %s507 = int_to_ptr.vmem [resolvable:$true] %s506
      %512 = dma.vmem_to_hbm [thread:$0]  %s507, 1024, %s4, [#allocation5], 64, 64, 4
    $region37: #{tpu_custom_call.1} parent=1 // pred_fallthru
      _
    // Predicated region
    $region38: #{tpu_custom_call.1} parent=1 // pred_check
      _
    $region39: #{tpu_custom_call.1} parent=1 // pred_check_branch
      %514 = sbr.rel (0) target = $region41
    $region40: #{tpu_custom_call.1} parent=1 // pred_region
      %515 = dma.done [#allocation5], 1024
    $region41: #{tpu_custom_call.1} parent=1 // pred_fallthru
      _
    %516 = vsyncpa [#allocation4], 1
    %517 = vsyncpa [#allocation7], 1
    %518 = vsyncpa [#allocation5], 1

</llo_original>
